<compile_context>
chip_gen: v7x
topology: tpu7x:2x2x1
jax: 0.10.0
libtpu: 0.0.40
codegen_flags: <defaults>
</compile_context>

<pallas_src>
import jax
import jax.numpy as jnp
from jax.experimental import pallas as pl
from jax.experimental.pallas import tpu as pltpu


def _lr_kernel(p_ref, x_ref, o_ref):
    # p_ref: (1, 2) f32 in SMEM -> [w, b]; x_ref/o_ref: (tile_rows, cols) VMEM.
    w = p_ref[0, 0]
    b = p_ref[0, 1]
    xv = x_ref[...].astype(jnp.float32)          # f32 compute for accuracy
    o_ref[...] = (xv * w + b).astype(o_ref.dtype)  # store in input dtype


def _pick_tile_bytes():
    """Input-tile byte budget per grid step, scaled to the chip's VMEM."""
    try:
        vmem = int(pltpu.get_tpu_info().vmem_capacity_bytes)
    except Exception:
        vmem = None
    if vmem is not None and vmem <= (64 << 20):
        return 4 << 20   # v7x: 64 MiB VMEM/TC -> 2x(4 in + 4 out) = 16 MiB pipeline
    return 8 << 20       # v5e / v6e: 128 MiB VMEM -> 32 MiB pipeline


def lr_forward(x, weight, bias, *, tile_rows_override=None):
    """x: (N, 1); weight: (1, 1); bias: (1,) -> (N, 1) in x.dtype.

    Matches PyTorch nn.Linear(1, 1): y = x @ W^T + b (compute in f32).
    `tile_rows_override` (multiple of 8) is for testing multi-step/ragged grids.
    """
    n = x.shape[0]
    out_dtype = x.dtype
    itemsize = x.dtype.itemsize

    # ---- lane-dense layout: pick the widest lane width that divides N ------
    cols = 128
    for c in (512, 256, 128):
        if n % c == 0:
            cols = c
            break

    x_flat = x.reshape(-1)
    rem = n % cols
    if rem != 0:
        # TODO(synk): this ragged-N fallback still pays one tiny pad pass and
        # one output-slice pass; the common N % 128 == 0 path below is copy-free.
        x_flat = jnp.pad(x_flat, (0, cols - rem))
    rows = x_flat.shape[0] // cols
    x_slab = x_flat.reshape(rows, cols)          # contiguous reshape: free bitcast

    # ---- tile rows: big enough to amortize per-step overhead ---------------
    if tile_rows_override is not None:
        tile_rows = int(tile_rows_override)
    else:
        tile_elems = _pick_tile_bytes() // itemsize
        tile_rows = max(8, (tile_elems // cols) // 8 * 8)
    if rows <= tile_rows:
        tile_rows = rows                         # single full block (any size ok)
    grid = (pl.cdiv(rows, tile_rows),)           # ragged last block masked by Pallas

    params = jnp.concatenate(
        [weight.reshape(-1), bias.reshape(-1)]
    ).astype(jnp.float32).reshape(1, 2)

    out_slab = pl.pallas_call(
        _lr_kernel,
        out_shape=jax.ShapeDtypeStruct((rows, cols), out_dtype),
        grid_spec=pltpu.PrefetchScalarGridSpec(
            num_scalar_prefetch=0,
            grid=grid,
            in_specs=[
                pl.BlockSpec((1, 2), lambda i: (0, 0),
                             memory_space=pltpu.MemorySpace.SMEM),
                pl.BlockSpec((tile_rows, cols), lambda i: (i, 0)),
            ],
            out_specs=pl.BlockSpec((tile_rows, cols), lambda i: (i, 0)),
        ),
        compiler_params=pltpu.CompilerParams(
            dimension_semantics=("parallel",),   # v7x: shard row tiles over 2 TCs
            vmem_limit_bytes=48 << 20,           # fits 2x(in+out) on all generations
        ),
    )(params, x_slab)

    out_flat = out_slab.reshape(-1)              # free bitcast
    if rem != 0:
        out_flat = out_flat[:n]                  # only in the ragged-N fallback
    return out_flat.reshape(n, 1)                # free bitcast


if __name__ == "__main__":
    key = jax.random.PRNGKey(0)
    kw, kb, k1, k2, k3 = jax.random.split(key, 5)

    # Deterministic parameters with nn.Linear(1, 1) shapes.
    weight = jax.random.uniform(kw, (1, 1), jnp.float32, -1.0, 1.0)
    bias = jax.random.uniform(kb, (1,), jnp.float32, -1.0, 1.0)

    fwd = jax.jit(lr_forward, static_argnames=("tile_rows_override",))

    def check(x, atol, **kw_):
        y = jax.block_until_ready(fwd(x, weight, bias, **kw_))
        y_ref = (x.astype(jnp.float32) @ weight.T + bias).astype(x.dtype)
        assert y.shape == (x.shape[0], 1), f"bad shape {y.shape}"
        assert y.dtype == x.dtype, f"bad dtype {y.dtype}"
        assert jnp.allclose(y.astype(jnp.float32), y_ref.astype(jnp.float32),
                            atol=atol), f"mismatch vs reference (N={x.shape[0]})"

    # Tiny batch (matches the module's scalar-regression use): fallback path.
    check(jax.random.normal(k1, (8, 1), jnp.float32), 1e-6)
    # N divisible by 512: zero-copy path; small tiles force a multi-step,
    # ragged grid to exercise Pallas edge-block masking.
    check(jax.random.normal(k2, (20480, 1), jnp.float32), 1e-6,
          tile_rows_override=16)
    # Ragged N: pad-to-128 fallback + multi-step ragged grid.
    check(jax.random.normal(k3, (5000, 1), jnp.float32), 1e-6,
          tile_rows_override=16)
    # bf16 input: output stays bf16 (half the writeback bytes), f32 compute.
    check(jax.random.normal(k1, (4096, 1), jnp.float32).astype(jnp.bfloat16),
          2e-2)

    print("KERNEL_OK")
</pallas_src>

<mosaic_0001>
module attributes {stable_mosaic.version = 11 : i64} {
  func.func @_lr_kernel(%arg0: i32, %arg1: memref<1x2xf32, #tpu.memory_space<smem>>, %arg2: memref<1x128xf32, #tpu.memory_space<vmem>>, %arg3: memref<1x128xf32, #tpu.memory_space<vmem>>) attributes {dimension_semantics = [#tpu.dimension_semantics<parallel>], iteration_bounds = array<i64: 1>, scalar_prefetch = 0 : i64, scratch_operands = 0 : i64, tpu.core_type = #tpu.core_type<tc>, window_params = [{transform_indices = @transform_0, window_bounds = array<i64: 1, 2>}, {transform_indices = @transform_1, window_bounds = array<i64: 1, 128>}, {transform_indices = @transform_2, window_bounds = array<i64: 1, 128>}]} {
    %c0 = arith.constant 0 : index
    %c0_0 = arith.constant 0 : index
    %0 = memref.load %arg1[%c0, %c0_0] : memref<1x2xf32, #tpu.memory_space<smem>>
    %c0_1 = arith.constant 0 : index
    %c1 = arith.constant 1 : index
    %1 = memref.load %arg1[%c0_1, %c1] : memref<1x2xf32, #tpu.memory_space<smem>>
    %c0_2 = arith.constant 0 : index
    %c0_3 = arith.constant 0 : index
    %2 = vector.load %arg2[%c0_2, %c0_3] : memref<1x128xf32, #tpu.memory_space<vmem>>, vector<1x128xf32>
    %3 = vector.broadcast %0 : f32 to vector<1x128xf32>
    %4 = arith.mulf %2, %3 : vector<1x128xf32>
    %5 = vector.broadcast %1 : f32 to vector<1x128xf32>
    %6 = arith.addf %4, %5 : vector<1x128xf32>
    %c0_4 = arith.constant 0 : index
    %c0_5 = arith.constant 0 : index
    %7 = vector.load %arg3[%c0_4, %c0_5] : memref<1x128xf32, #tpu.memory_space<vmem>>, vector<1x128xf32>
    tpu.vector_store %arg3[%c0_4, %c0_5], %6 {strides = array<i32>} : memref<1x128xf32, #tpu.memory_space<vmem>>, vector<1x128xf32>,
    return
  }
  func.func @transform_0(%arg0: i32) -> (i32, i32) {
    %c0_i32 = arith.constant 0 : i32
    %c0_i32_0 = arith.constant 0 : i32
    %c0_i32_1 = arith.constant 0 : i32
    return %c0_i32, %c0_i32_0 : i32, i32
  }
  func.func @transform_1(%arg0: i32) -> (i32, i32) {
    %c0_i32 = arith.constant 0 : i32
    %c0_i32_0 = arith.constant 0 : i32
    return %arg0, %c0_i32 : i32, i32
  }
  func.func @transform_2(%arg0: i32) -> (i32, i32) {
    %c0_i32 = arith.constant 0 : i32
    %c0_i32_0 = arith.constant 0 : i32
    return %arg0, %c0_i32 : i32, i32
  }
}

</mosaic_0001>

<llo_original>
// kernel: lr_forward.1
$region0: #{lr_forward.1}
  #allocation0 [shape = 'u32[]', space=smem, size = 0x4, offset = 0x4, fixed_abs, tag = 'smem constant byte address 0x4 - core index']
  #allocation1 [shape = 'u32[144,128]{1,0:T(1,128)}', space=vmem, size = 0x12000, scoped, tag = 'internal scratch']
  %s0 = inlined_call_operand.vmem [shape: f32[1,2], index: 0, kind: input, shape index: {}]
  %s1 = inlined_call_operand.vmem [shape: f32[1,128], index: 1, kind: input, shape index: {}]
  %s2 = inlined_call_operand.vmem [shape: f32[1,128], index: 2, kind: output, shape index: {}]
  %s3 = sld [smem:[#allocation0]]
  $region22: #{lr_forward.1} parent=0
    _
  %s5 = ssub.s32 1, %s3
  %s6 = scalar_select 0, %s5, %s3
  $region1: #{lr_forward.1} parent=0
    #allocation2 [shape = 'u8[512]{0}', space=smem, size = 0x200, scoped, tag = 'input window, operand 0, single buffered']
    #allocation3 [shape = 's32[1]{0}', space=sflag, size = 0x4, scoped, tag = 'scoped memory for lr_forward.1']
    %7 = vsyncpa [#allocation3], 0
    // Predicated region
    $region2: #{lr_forward.1} parent=1 // pred_check
      _
    $region3: #{lr_forward.1} parent=1 // pred_check_branch
      %9 = sbr.rel (0) target = $region5
    $region4: #{lr_forward.1} parent=1 // pred_region
      %s11 = ssub.s32 16, 16
      %12 = vsyncadd [#allocation3], %s11
      %s14 = sshll.u32 %s0, 4
      %s15 = int_to_ptr.vmem [resolvable:$true] %s14
      %17 = dma.vmem_to_smem %s15, 16, [#allocation2], [#allocation3]
    $region5: #{lr_forward.1} parent=1 // pred_fallthru
      _
    // Predicated region
    $region6: #{lr_forward.1} parent=1 // pred_check
      _
    $region7: #{lr_forward.1} parent=1 // pred_check_branch
      %19 = sbr.rel (0) target = $region9
    $region8: #{lr_forward.1} parent=1 // pred_region
      _
    $region9: #{lr_forward.1} parent=1 // pred_fallthru
      _
    // Predicated region
    $region10: #{lr_forward.1} parent=1 // pred_check
      _
    $region11: #{lr_forward.1} parent=1 // pred_check_branch
      %21 = sbr.rel (0) target = $region13
    $region12: #{lr_forward.1} parent=1 // pred_region
      %22 = dma.done [#allocation3], 16
    $region13: #{lr_forward.1} parent=1 // pred_fallthru
      _
    %23 = sfence
    %s24 = sld [smem:[#allocation2]]
    %s25 = sld [smem:[#allocation2 + $0x1]]
    %v26 = vld [vmem:[%s1] sm:$0x1]
    %v27 = vstv %s24
    %v28 = vmul.f32 %v26, %v27
    %v29 = vstv %s25
    %v30 = vadd.f32 %v28, %v29
    %31 = vst [vmem:[%s2] sm:$0x1] %v30
    // Predicated region
    $region14: #{lr_forward.1} parent=1 // pred_check
      _
    $region15: #{lr_forward.1} parent=1 // pred_check_branch
      %33 = sbr.rel (0) target = $region17
    $region16: #{lr_forward.1} parent=1 // pred_region
      _
    $region17: #{lr_forward.1} parent=1 // pred_fallthru
      _
    // Predicated region
    $region18: #{lr_forward.1} parent=1 // pred_check
      _
    $region19: #{lr_forward.1} parent=1 // pred_check_branch
      %35 = sbr.rel (0) target = $region21
    $region20: #{lr_forward.1} parent=1 // pred_region
      _
    $region21: #{lr_forward.1} parent=1 // pred_fallthru
      _
    %36 = vsyncpa [#allocation3], 1

</llo_original>
